<compile_context>
chip_gen: v5e
topology: v5e:2x2
jax: 0.10.0
libtpu: 0.0.40
codegen_flags: <defaults>
</compile_context>

<pallas_src>
from functools import partial

import jax
import jax.numpy as jnp
from jax.experimental import pallas as pl
from jax.experimental.pallas import tpu as pltpu

BETA = 0.99999
EPSILON = 1e-5
VAR_FLOOR = 0.01

_LANE = 128
_PER_BUF_CAP = 4 * 1024 * 1024      # per (B, tile_f) f32 buffer; safe on v5e/v6e/v7x
_VMEM_CAP = 40 * 1024 * 1024        # stay well inside v7x's 64 MiB physical VMEM


def popart_kernel(inv_denom_ref,                       # SMEM (1,) f32
                  x_ref, rm_ref, rmsq_ref,             # VMEM tiles
                  out_ref, new_rm_ref, new_rmsq_ref):
    x = x_ref[...].astype(jnp.float32)                 # (B, TILE_F) f32
    inv_b = jnp.float32(1.0 / x.shape[0])

    # Batch statistics over the batch axis (norm_axes = 1).
    batch_mean = jnp.sum(x, axis=0, keepdims=True) * inv_b          # (1, TF)
    batch_sq_mean = jnp.sum(x * x, axis=0, keepdims=True) * inv_b   # (1, TF)

    w = jnp.float32(BETA)                               # per_element_update=False
    one_minus_w = jnp.float32(1.0 - BETA)

    # EMA state update (running_mean.mul_(w).add_(bm * (1 - w)), etc.)
    new_rm = rm_ref[...] * w + batch_mean * one_minus_w
    new_rmsq = rmsq_ref[...] * w + batch_sq_mean * one_minus_w
    new_rm_ref[...] = new_rm
    new_rmsq_ref[...] = new_rmsq

    # Debiased mean / var with clamps.  The reciprocal of the clamped
    # debiasing term is a scalar precomputed in the wrapper (SMEM) -> two
    # multiplies here, no vector divide.
    inv_denom = inv_denom_ref[0]
    dm = new_rm * inv_denom                             # (1, TF)
    dmsq = new_rmsq * inv_denom                         # (1, TF)
    var = jnp.maximum(dmsq - dm * dm, jnp.float32(VAR_FLOOR))

    # rsqrt on the (1, TF) row (EUP work is O(F)), broadcast multiply on the
    # (B, TF) tile (VPU).
    inv_std = jax.lax.rsqrt(var)                        # (1, TF)
    out_ref[...] = ((x - dm) * inv_std).astype(out_ref.dtype)


def _round_up(v: int, m: int) -> int:
    return -(-v // m) * m


def _choose_tile_f(B: int, F: int) -> int:
    if F <= _LANE:
        # Single block; block dim == full array dim satisfies the (8,128) rule
        # and needs no padding/masking at all.
        return F
    f128 = _round_up(F, _LANE)
    # Largest lane-aligned tile whose f32 (B, tile) buffer stays under the cap.
    cap_cols = max(_LANE, (_PER_BUF_CAP // (B * 4)) // _LANE * _LANE)
    # Prefer >= 2 feature tiles so dimension_semantics=("parallel",) can shard
    # across both v7x TensorCores while keeping tiles wide (>= 128 lanes).
    half = max(_LANE, _round_up(f128 // 2, _LANE))
    return min(f128, cap_cols, half)


def _vmem_limit_bytes(B: int, tile_f: int, in_itemsize: int, out_itemsize: int) -> int:
    tile_elems = B * tile_f
    est = (2 * tile_elems * in_itemsize     # double-buffered x tiles
           + 2 * tile_elems * out_itemsize  # double-buffered out tiles
           + 2 * tile_elems * 4             # in-kernel f32 temporaries (x, x*x)
           + 32 * tile_f * 4                # (1, tile_f) state tiles / row temps
           + (2 << 20))                     # headroom
    if est > _VMEM_CAP:
        # TODO(synk): for very large batches (B*128*4 > ~4 MiB) add a
        # batch-tiled two-pass grid ((f, b) with the batch axis "arbitrary"):
        # pass 1 accumulates per-feature sums into a (1, tile_f) scratch,
        # pass 2 normalizes.
        raise ValueError(
            f"PopArt kernel VMEM plan needs ~{est >> 20} MiB "
            f"(> {_VMEM_CAP >> 20} MiB cap); batch dimension too large for the "
            "single-pass feature-tiled kernel.")
    return max(est, 16 * 1024 * 1024)


@partial(jax.jit, static_argnames=("out_dtype",))
def popart_forward(x, running_mean, running_mean_sq, debiasing_term, *, out_dtype=None):
    """Train-mode PopArt forward. Returns (out, new_mean, new_mean_sq, new_debias)."""
    B, F = x.shape
    out_dtype = jnp.float32 if out_dtype is None else jnp.dtype(out_dtype)

    # Scalar debiasing-term EMA + its clamped reciprocal (pure scalar work).
    w = jnp.float32(BETA)
    new_dbt = jnp.asarray(debiasing_term, jnp.float32) * w + jnp.float32(1.0 - BETA)
    inv_denom = (1.0 / jnp.maximum(new_dbt, EPSILON)).reshape((1,)).astype(jnp.float32)

    rm = running_mean.reshape(1, F).astype(jnp.float32)
    rmsq = running_mean_sq.reshape(1, F).astype(jnp.float32)

    tile_f = _choose_tile_f(B, F)
    grid = (pl.cdiv(F, tile_f),)

    in_itemsize = jnp.dtype(x.dtype).itemsize
    out_itemsize = jnp.dtype(out_dtype).itemsize
    vmem_limit = _vmem_limit_bytes(B, tile_f, in_itemsize, out_itemsize)

    cost = pl.CostEstimate(
        flops=6 * B * F,
        transcendentals=F,
        bytes_accessed=B * F * (in_itemsize + out_itemsize) + 4 * F * 4,
    )

    out, new_rm, new_rmsq = pl.pallas_call(
        popart_kernel,
        out_shape=(
            jax.ShapeDtypeStruct((B, F), out_dtype),
            jax.ShapeDtypeStruct((1, F), jnp.float32),
            jax.ShapeDtypeStruct((1, F), jnp.float32),
        ),
        grid=grid,
        in_specs=[
            pl.BlockSpec(memory_space=pltpu.MemorySpace.SMEM),   # inv_denom
            pl.BlockSpec((B, tile_f), lambda j: (0, j)),         # x
            pl.BlockSpec((1, tile_f), lambda j: (0, j)),         # running_mean
            pl.BlockSpec((1, tile_f), lambda j: (0, j)),         # running_mean_sq
        ],
        out_specs=(
            pl.BlockSpec((B, tile_f), lambda j: (0, j)),         # out
            pl.BlockSpec((1, tile_f), lambda j: (0, j)),         # new running_mean
            pl.BlockSpec((1, tile_f), lambda j: (0, j)),         # new running_mean_sq
        ),
        # Update the EMA state in place (matches the module's in-place mutation).
        input_output_aliases={2: 1, 3: 2},
        compiler_params=pltpu.CompilerParams(
            dimension_semantics=("parallel",),
            vmem_limit_bytes=vmem_limit),
        cost_estimate=cost,
    )(inv_denom, x, rm, rmsq)

    return out, new_rm.reshape(F), new_rmsq.reshape(F), new_dbt.reshape(())


def popart_forward_ref(x, rm, rmsq, dbt):
    """Pure-JAX reference mirroring the PyTorch module (train=True)."""
    x = x.astype(jnp.float32)
    batch_mean = jnp.mean(x, axis=0)
    batch_sq_mean = jnp.mean(x * x, axis=0)
    w = BETA
    new_rm = rm * w + batch_mean * (1.0 - w)
    new_rmsq = rmsq * w + batch_sq_mean * (1.0 - w)
    new_dbt = dbt * w + (1.0 - w)
    denom = jnp.maximum(new_dbt, EPSILON)
    dm = new_rm / denom
    dmsq = new_rmsq / denom
    var = jnp.maximum(dmsq - dm ** 2, VAR_FLOOR)
    out = (x - dm[None]) / jnp.sqrt(var)[None]
    return out, new_rm, new_rmsq, new_dbt


def _check(x, rm, rmsq, dbt, out_dtype=None, out_rtol=1e-5, out_atol=1e-5):
    out, n_rm, n_rmsq, n_dbt = popart_forward(x, rm, rmsq, dbt, out_dtype=out_dtype)
    jax.block_until_ready((out, n_rm, n_rmsq, n_dbt))
    r_out, r_rm, r_rmsq, r_dbt = popart_forward_ref(x, rm, rmsq, dbt)
    assert jnp.allclose(out, r_out, rtol=out_rtol, atol=out_atol)
    assert jnp.allclose(n_rm, r_rm, rtol=1e-6, atol=1e-7)
    assert jnp.allclose(n_rmsq, r_rmsq, rtol=1e-6, atol=1e-7)
    assert jnp.allclose(n_dbt, r_dbt, rtol=1e-6, atol=1e-7)


if __name__ == "__main__":
    key = jax.random.PRNGKey(0)
    k1, k2, k3 = jax.random.split(key, 3)

    # Case 1: input_shape = 128 features, norm_axes = 1 -> (B, 128), aligned F.
    B, F = 32, 128
    x = jax.random.normal(k1, (B, F), dtype=jnp.float32) * 3.0 + 1.5
    running_mean = jnp.zeros((F,), dtype=jnp.float32)
    running_mean_sq = jnp.zeros((F,), dtype=jnp.float32)
    debiasing_term = jnp.asarray(0.0, dtype=jnp.float32)
    _check(x, running_mean, running_mean_sq, debiasing_term)

    # Case 2: non-128-aligned feature count exercises the partial last tile
    # (no wrapper pad/slice anymore).
    B2, F2 = 16, 200
    x2 = jax.random.normal(k2, (B2, F2), dtype=jnp.float32) * 0.7 - 2.0
    rm2 = jnp.zeros((F2,), dtype=jnp.float32)
    rmsq2 = jnp.zeros((F2,), dtype=jnp.float32)
    dbt2 = jnp.asarray(0.0, dtype=jnp.float32)
    _check(x2, rm2, rmsq2, dbt2)

    # Case 3: bf16 activations with bf16 output (halves store bytes), multi-tile
    # feature grid with a partial last tile.
    B3, F3 = 8, 384
    x3 = (jax.random.normal(k3, (B3, F3), dtype=jnp.float32) * 2.0 + 0.5).astype(jnp.bfloat16)
    rm3 = jnp.zeros((F3,), dtype=jnp.float32)
    rmsq3 = jnp.zeros((F3,), dtype=jnp.float32)
    dbt3 = jnp.asarray(0.0, dtype=jnp.float32)
    _check(x3, rm3, rmsq3, dbt3, out_dtype=jnp.bfloat16, out_rtol=2e-2, out_atol=2e-2)

    print("KERNEL_OK")
</pallas_src>

<mosaic_0001>
module attributes {stable_mosaic.version = 11 : i64} {
  func.func @popart_kernel(%arg0: i32, %arg1: memref<1xf32, #tpu.memory_space<smem>>, %arg2: memref<32x128xf32, #tpu.memory_space<vmem>>, %arg3: memref<1x128xf32, #tpu.memory_space<vmem>>, %arg4: memref<1x128xf32, #tpu.memory_space<vmem>>, %arg5: memref<32x128xf32, #tpu.memory_space<vmem>>, %arg6: memref<1x128xf32, #tpu.memory_space<vmem>>, %arg7: memref<1x128xf32, #tpu.memory_space<vmem>>) attributes {dimension_semantics = [#tpu.dimension_semantics<parallel>], iteration_bounds = array<i64: 1>, scalar_prefetch = 0 : i64, scratch_operands = 0 : i64, tpu.core_type = #tpu.core_type<tc>, window_params = [{transform_indices = @transform_0, window_bounds = array<i64: 1>}, {transform_indices = @transform_1, window_bounds = array<i64: 32, 128>}, {transform_indices = @transform_2, window_bounds = array<i64: 1, 128>}, {transform_indices = @transform_3, window_bounds = array<i64: 1, 128>}, {transform_indices = @transform_4, window_bounds = array<i64: 32, 128>}, {transform_indices = @transform_5, window_bounds = array<i64: 1, 128>}, {transform_indices = @transform_6, window_bounds = array<i64: 1, 128>}]} {
    %c0 = arith.constant 0 : index
    %c0_0 = arith.constant 0 : index
    %0 = vector.load %arg2[%c0, %c0_0] : memref<32x128xf32, #tpu.memory_space<vmem>>, vector<32x128xf32>
    %cst = arith.constant dense<0.000000e+00> : vector<128xf32>
    %1 = vector.multi_reduction <add>, %0, %cst [0] : vector<32x128xf32> to vector<128xf32>
    %2 = vector.shape_cast %1 : vector<128xf32> to vector<1x128xf32>
    %cst_1 = arith.constant 3.125000e-02 : f32
    %3 = vector.broadcast %cst_1 : f32 to vector<1x128xf32>
    %4 = arith.mulf %2, %3 : vector<1x128xf32>
    %5 = arith.mulf %0, %0 : vector<32x128xf32>
    %cst_2 = arith.constant dense<0.000000e+00> : vector<128xf32>
    %6 = vector.multi_reduction <add>, %5, %cst_2 [0] : vector<32x128xf32> to vector<128xf32>
    %7 = vector.shape_cast %6 : vector<128xf32> to vector<1x128xf32>
    %cst_3 = arith.constant 3.125000e-02 : f32
    %8 = vector.broadcast %cst_3 : f32 to vector<1x128xf32>
    %9 = arith.mulf %7, %8 : vector<1x128xf32>
    %c0_4 = arith.constant 0 : index
    %c0_5 = arith.constant 0 : index
    %10 = vector.load %arg3[%c0_4, %c0_5] : memref<1x128xf32, #tpu.memory_space<vmem>>, vector<1x128xf32>
    %cst_6 = arith.constant 0.999989986 : f32
    %11 = vector.broadcast %cst_6 : f32 to vector<1x128xf32>
    %12 = arith.mulf %10, %11 : vector<1x128xf32>
    %cst_7 = arith.constant 9.99999974E-6 : f32
    %13 = vector.broadcast %cst_7 : f32 to vector<1x128xf32>
    %14 = arith.mulf %4, %13 : vector<1x128xf32>
    %15 = arith.addf %12, %14 : vector<1x128xf32>
    %c0_8 = arith.constant 0 : index
    %c0_9 = arith.constant 0 : index
    %16 = vector.load %arg4[%c0_8, %c0_9] : memref<1x128xf32, #tpu.memory_space<vmem>>, vector<1x128xf32>
    %cst_10 = arith.constant 0.999989986 : f32
    %17 = vector.broadcast %cst_10 : f32 to vector<1x128xf32>
    %18 = arith.mulf %16, %17 : vector<1x128xf32>
    %cst_11 = arith.constant 9.99999974E-6 : f32
    %19 = vector.broadcast %cst_11 : f32 to vector<1x128xf32>
    %20 = arith.mulf %9, %19 : vector<1x128xf32>
    %21 = arith.addf %18, %20 : vector<1x128xf32>
    %c0_12 = arith.constant 0 : index
    %c0_13 = arith.constant 0 : index
    %22 = vector.load %arg6[%c0_12, %c0_13] : memref<1x128xf32, #tpu.memory_space<vmem>>, vector<1x128xf32>
    tpu.vector_store %arg6[%c0_12, %c0_13], %15 {strides = array<i32>} : memref<1x128xf32, #tpu.memory_space<vmem>>, vector<1x128xf32>,
    %c0_14 = arith.constant 0 : index
    %c0_15 = arith.constant 0 : index
    %23 = vector.load %arg7[%c0_14, %c0_15] : memref<1x128xf32, #tpu.memory_space<vmem>>, vector<1x128xf32>
    tpu.vector_store %arg7[%c0_14, %c0_15], %21 {strides = array<i32>} : memref<1x128xf32, #tpu.memory_space<vmem>>, vector<1x128xf32>,
    %c0_16 = arith.constant 0 : index
    %24 = memref.load %arg1[%c0_16] : memref<1xf32, #tpu.memory_space<smem>>
    %25 = vector.broadcast %24 : f32 to vector<1x128xf32>
    %26 = arith.mulf %15, %25 : vector<1x128xf32>
    %27 = vector.broadcast %24 : f32 to vector<1x128xf32>
    %28 = arith.mulf %21, %27 : vector<1x128xf32>
    %29 = arith.mulf %26, %26 : vector<1x128xf32>
    %30 = arith.subf %28, %29 : vector<1x128xf32>
    %cst_17 = arith.constant 0.00999999977 : f32
    %31 = vector.broadcast %cst_17 : f32 to vector<1x128xf32>
    %32 = arith.maximumf %30, %31 : vector<1x128xf32>
    %33 = math.rsqrt %32 : vector<1x128xf32>
    %34 = vector.broadcast %26 : vector<1x128xf32> to vector<32x128xf32>
    %35 = arith.subf %0, %34 : vector<32x128xf32>
    %36 = vector.broadcast %33 : vector<1x128xf32> to vector<32x128xf32>
    %37 = arith.mulf %35, %36 : vector<32x128xf32>
    %c0_18 = arith.constant 0 : index
    %c0_19 = arith.constant 0 : index
    %38 = vector.load %arg5[%c0_18, %c0_19] : memref<32x128xf32, #tpu.memory_space<vmem>>, vector<32x128xf32>
    tpu.vector_store %arg5[%c0_18, %c0_19], %37 {strides = array<i32>} : memref<32x128xf32, #tpu.memory_space<vmem>>, vector<32x128xf32>,
    return
  }
  func.func @transform_0(%arg0: i32) -> i32 {
    %c0_i32 = arith.constant 0 : i32
    %c0_i32_0 = arith.constant 0 : i32
    return %c0_i32 : i32
  }
  func.func @transform_1(%arg0: i32) -> (i32, i32) {
    %c0_i32 = arith.constant 0 : i32
    %c0_i32_0 = arith.constant 0 : i32
    return %c0_i32, %arg0 : i32, i32
  }
  func.func @transform_2(%arg0: i32) -> (i32, i32) {
    %c0_i32 = arith.constant 0 : i32
    %c0_i32_0 = arith.constant 0 : i32
    return %c0_i32, %arg0 : i32, i32
  }
  func.func @transform_3(%arg0: i32) -> (i32, i32) {
    %c0_i32 = arith.constant 0 : i32
    %c0_i32_0 = arith.constant 0 : i32
    return %c0_i32, %arg0 : i32, i32
  }
  func.func @transform_4(%arg0: i32) -> (i32, i32) {
    %c0_i32 = arith.constant 0 : i32
    %c0_i32_0 = arith.constant 0 : i32
    return %c0_i32, %arg0 : i32, i32
  }
  func.func @transform_5(%arg0: i32) -> (i32, i32) {
    %c0_i32 = arith.constant 0 : i32
    %c0_i32_0 = arith.constant 0 : i32
    return %c0_i32, %arg0 : i32, i32
  }
  func.func @transform_6(%arg0: i32) -> (i32, i32) {
    %c0_i32 = arith.constant 0 : i32
    %c0_i32_0 = arith.constant 0 : i32
    return %c0_i32, %arg0 : i32, i32
  }
}

</mosaic_0001>

<llo_original>
// kernel: popart_forward.1
$region0: #{popart_forward.1}
  #allocation0 [shape = 'u32[]', space=smem, size = 0x4, offset = 0x4, fixed_abs, tag = 'smem constant byte address 0x4 - core index']
  #allocation1 [shape = 'u32[72,128]{1,0:T(1,128)}', space=vmem, size = 0x9000, scoped, tag = 'internal scratch']
  #allocation2 [shape = 'f32[1]{0:T(128)S(6)}', space=smem, size = 0x200, scoped, tag = 'scoped memory for popart_forward.1']
  %s0 = inlined_call_operand.<no memory space> [shape: f32[1], index: 0, kind: input, shape index: {}]
  %s1 = inlined_call_operand.hbm [shape: f32[32,128], index: 1, kind: input, shape index: {}]
  %s2 = inlined_call_operand.vmem [shape: f32[1,128], index: 2, kind: input, shape index: {}, may-alias: {2,5}]
  %s3 = inlined_call_operand.vmem [shape: f32[1,128], index: 3, kind: input, shape index: {}, may-alias: {3,6}]
  %s4 = inlined_call_operand.hbm [shape: f32[32,128], index: 4, kind: output, shape index: {0}]
  %s5 = inlined_call_operand.vmem [shape: f32[1,128], index: 5, kind: output, shape index: {1}, may-alias: {2,5}]
  %s6 = inlined_call_operand.vmem [shape: f32[1,128], index: 6, kind: output, shape index: {2}, may-alias: {3,6}]
  %7 = xla_tuple %s4, %s5, %s6
  %s8 = sld [smem:[#allocation0]]
  $region46: #{popart_forward.1} parent=0
    _
  %s10 = ssub.s32 1, %s8
  %s11 = scalar_select 0, %s10, %s8
  %12 = sst [smem:[#allocation2]] %s0
  $region1: #{popart_forward.1} parent=0
    #allocation3 [shape = 'u8[16384]{0}', space=vmem, size = 0x4000, scoped, tag = 'input window, operand 1, single buffered']
    #allocation4 [shape = 's32[1]{0}', space=sflag, size = 0x4, scoped, tag = 'scoped memory for popart_forward.1']
    #allocation5 [shape = 's32[1]{0}', space=sflag, size = 0x4, scoped, tag = 'scoped memory for popart_forward.1']
    #allocation6 [shape = 'u8[16384]{0}', space=vmem, size = 0x4000, scoped, tag = 'output window, operand 0, single buffered']
    %13 = vsyncpa [#allocation4], 0
    %14 = vsyncpa [#allocation5], 0
    // Predicated region
    $region2: #{popart_forward.1} parent=1 // pred_check
      _
    $region3: #{popart_forward.1} parent=1 // pred_check_branch
      %16 = sbr.rel (0) target = $region5
    $region4: #{popart_forward.1} parent=1 // pred_region
      _
    $region5: #{popart_forward.1} parent=1 // pred_fallthru
      _
    // Predicated region
    $region6: #{popart_forward.1} parent=1 // pred_check
      _
    $region7: #{popart_forward.1} parent=1 // pred_check_branch
      %18 = sbr.rel (0) target = $region9
    $region8: #{popart_forward.1} parent=1 // pred_region
      %20 = vsyncadd [#allocation4], 0
      %s21 = sshll.u32 %s1, 4
      %s22 = int_to_ptr.hbm [resolvable:$true] %s21
      %s23 = sshll.u32 [#allocation3], 4
      %s24 = int_to_ptr.vmem [resolvable:$true] %s23
      %29 = dma.hbm_to_vmem [thread:$0]  %s22, 512, %s24, [#allocation4], 128, 128, 8
    $region9: #{popart_forward.1} parent=1 // pred_fallthru
      _
    // Predicated region
    $region10: #{popart_forward.1} parent=1 // pred_check
      _
    $region11: #{popart_forward.1} parent=1 // pred_check_branch
      %31 = sbr.rel (0) target = $region13
    $region12: #{popart_forward.1} parent=1 // pred_region
      _
    $region13: #{popart_forward.1} parent=1 // pred_fallthru
      _
    // Predicated region
    $region14: #{popart_forward.1} parent=1 // pred_check
      _
    $region15: #{popart_forward.1} parent=1 // pred_check_branch
      %33 = sbr.rel (0) target = $region17
    $region16: #{popart_forward.1} parent=1 // pred_region
      _
    $region17: #{popart_forward.1} parent=1 // pred_fallthru
      _
    // Predicated region
    $region18: #{popart_forward.1} parent=1 // pred_check
      _
    $region19: #{popart_forward.1} parent=1 // pred_check_branch
      %35 = sbr.rel (0) target = $region21
    $region20: #{popart_forward.1} parent=1 // pred_region
      %37 = dma.done [#allocation4], 512
    $region21: #{popart_forward.1} parent=1 // pred_fallthru
      _
    %v38 = vld [vmem:[#allocation3] sm:$0xff]
    %v39 = vld [vmem:[#allocation3 + $0x8] sm:$0xff]
    %v40 = vld [vmem:[#allocation3 + $0x10] sm:$0xff]
    %v41 = vld [vmem:[#allocation3 + $0x18] sm:$0xff]
    %v42 = vadd.f32 %v38, %v39
    %v43 = vadd.f32 %v42, %v40
    %v44 = vadd.f32 %v43, %v41
    %v45 = vrot.slane %v44, 4
    %v46 = vadd.f32 %v44, %v45
    %v47 = vrot.slane %v46, 2
    %v48 = vadd.f32 %v46, %v47
    %v49 = vrot.slane %v48, 1
    %v50 = vadd.f32 %v48, %v49
    %v51 = vmul.f32 %v50, 0.03125
    %v52 = vmul.f32 %v38, %v38
    %v53 = vmul.f32 %v39, %v39
    %v54 = vmul.f32 %v40, %v40
    %v55 = vmul.f32 %v41, %v41
    %v56 = vadd.f32 %v52, %v53
    %v57 = vadd.f32 %v56, %v54
    %v58 = vadd.f32 %v57, %v55
    %v59 = vrot.slane %v58, 4
    %v60 = vadd.f32 %v58, %v59
    %v61 = vrot.slane %v60, 2
    %v62 = vadd.f32 %v60, %v61
    %v63 = vrot.slane %v62, 1
    %v64 = vadd.f32 %v62, %v63
    %v65 = vmul.f32 %v64, 0.03125
    %v66 = vld [vmem:[%s2] sm:$0x1]
    %v67 = vmul.f32 %v66, 0.99999
    %v68 = vmul.f32 %v51, 1e-05
    %v69 = vadd.f32 %v67, %v68
    %v70 = vld [vmem:[%s3] sm:$0x1]
    %v71 = vmul.f32 %v70, 0.99999
    %v72 = vmul.f32 %v65, 1e-05
    %v73 = vadd.f32 %v71, %v72
    %74 = vst [vmem:[%s5] sm:$0x1] %v69
    %75 = vst [vmem:[%s6] sm:$0x1] %v73
    %s76 = sld [smem:[#allocation2]]
    %v77 = vstv %s76
    %v78 = vmul.f32 %v69, %v77
    %v79 = vmul.f32 %v73, %v77
    %v80 = vmul.f32 %v78, %v78
    %v81 = vsub.f32 %v79, %v80
    %v82 = vmax.f32 %v81, 0.01
    %v83 = vrsqrt.pop %v82
    %v84 = vmul.f32 %v83, %v82
    %v85 = vmul.f32 %v84, %v83
    %v86 = vmul.f32 0.5, %v85
    %v87 = vsub.f32 1.5, %v86
    %v88 = vmul.f32 %v83, %v87
    %vm89 = vweird.f32 %v82
    %vm90 = vweird.f32 %v83
    %vm91 = vmor %vm89, %vm90
    %v92 = vsel %vm91, %v83, %v88
    %v94 = vperm.slane %v78, 0
    %v96 = vsub.f32 %v38, %v94
    %v97 = vsub.f32 %v39, %v94
    %v98 = vsub.f32 %v40, %v94
    %v99 = vsub.f32 %v41, %v94
    %v101 = vperm.slane %v92, 0
    %v103 = vmul.f32 %v96, %v101
    %v104 = vmul.f32 %v97, %v101
    %v105 = vmul.f32 %v98, %v101
    %v106 = vmul.f32 %v99, %v101
    %107 = vst [vmem:[#allocation6] sm:$0xff] %v103
    %108 = vst [vmem:[#allocation6 + $0x8] sm:$0xff] %v104
    %109 = vst [vmem:[#allocation6 + $0x10] sm:$0xff] %v105
    %110 = vst [vmem:[#allocation6 + $0x18] sm:$0xff] %v106
    // Predicated region
    $region22: #{popart_forward.1} parent=1 // pred_check
      _
    $region23: #{popart_forward.1} parent=1 // pred_check_branch
      %112 = sbr.rel (0) target = $region25
    $region24: #{popart_forward.1} parent=1 // pred_region
      %114 = vsyncadd [#allocation5], 0
      %s115 = sshll.u32 [#allocation6], 4
      %s116 = int_to_ptr.vmem [resolvable:$true] %s115
      %s117 = sshll.u32 %s4, 4
      %s118 = int_to_ptr.hbm [resolvable:$true] %s117
      %123 = dma.vmem_to_hbm [thread:$0]  %s116, 512, %s118, [#allocation5], 128, 128, 8
    $region25: #{popart_forward.1} parent=1 // pred_fallthru
      _
    // Predicated region
    $region26: #{popart_forward.1} parent=1 // pred_check
      _
    $region27: #{popart_forward.1} parent=1 // pred_check_branch
      %125 = sbr.rel (0) target = $region29
    $region28: #{popart_forward.1} parent=1 // pred_region
      _
    $region29: #{popart_forward.1} parent=1 // pred_fallthru
      _
    // Predicated region
    $region30: #{popart_forward.1} parent=1 // pred_check
      _
    $region31: #{popart_forward.1} parent=1 // pred_check_branch
      %127 = sbr.rel (0) target = $region33
    $region32: #{popart_forward.1} parent=1 // pred_region
      _
    $region33: #{popart_forward.1} parent=1 // pred_fallthru
      _
    // Predicated region
    $region34: #{popart_forward.1} parent=1 // pred_check
      _
    $region35: #{popart_forward.1} parent=1 // pred_check_branch
      %129 = sbr.rel (0) target = $region37
    $region36: #{popart_forward.1} parent=1 // pred_region
      %131 = dma.done [#allocation5], 512
    $region37: #{popart_forward.1} parent=1 // pred_fallthru
      _
    // Predicated region
    $region38: #{popart_forward.1} parent=1 // pred_check
      _
    $region39: #{popart_forward.1} parent=1 // pred_check_branch
      %133 = sbr.rel (0) target = $region41
    $region40: #{popart_forward.1} parent=1 // pred_region
      _
    $region41: #{popart_forward.1} parent=1 // pred_fallthru
      _
    // Predicated region
    $region42: #{popart_forward.1} parent=1 // pred_check
      _
    $region43: #{popart_forward.1} parent=1 // pred_check_branch
      %135 = sbr.rel (0) target = $region45
    $region44: #{popart_forward.1} parent=1 // pred_region
      _
    $region45: #{popart_forward.1} parent=1 // pred_fallthru
      _
    %136 = vsyncpa [#allocation4], 1
    %137 = vsyncpa [#allocation5], 1

</llo_original>
